<compile_context>
chip_gen: v5e
topology: v5e:2x2
jax: 0.10.0
libtpu: 0.0.40
codegen_flags: <defaults>
</compile_context>

<pallas_src>
import functools

import jax
import jax.numpy as jnp
from jax.experimental import pallas as pl
from jax.experimental.pallas import tpu as pltpu

_MIB = 1024 * 1024


def _round_up(a, b):
    return -(-a // b) * b


def _cdiv(a, b):
    return -(-a // b)


def _supports_pipeline_mode():
    if not hasattr(pl, "Buffered"):
        return False
    try:
        pl.BlockSpec((8, 128), lambda i: (0, 0), pipeline_mode=pl.Buffered(1))
        return True
    except Exception:
        return False


_HAS_PIPELINE_MODE = _supports_pipeline_mode()


def _tpu_generation():
    try:
        kind = jax.devices()[0].device_kind.lower()
    except Exception:
        return None
    for g in ("v7", "v6", "v5", "v4"):
        if g in kind:
            return g
    return None


def _vmem_capacity_bytes(gen):
    try:
        return int(pltpu.get_tpu_info().vmem_capacity_bytes)
    except Exception:
        pass
    if gen == "v7":
        return 64 * _MIB       # v7x: 64 MiB per TensorCore
    if gen in ("v5", "v6"):
        return 128 * _MIB      # v5e / v6e: 128 MiB
    return 64 * _MIB           # unknown: stay conservative


def _relu(h):
    return jnp.maximum(h, 0.0)


# ----------------------------- kernels --------------------------------------


def _mlp_kernel_resident(x_ref, w1_ref, b1_ref, w2_ref, b2_ref, o_ref, *, act):
    # x_ref: (tm, Dp)  w1/w2: (Dp, Dp) resident in VMEM  b1/b2: (1, Dp) f32
    w_dtype = w1_ref.dtype
    x = x_ref[...].astype(w_dtype)
    h = jnp.dot(x, w1_ref[...], preferred_element_type=jnp.float32) + b1_ref[...]
    h = act(h)
    y = jnp.dot(h.astype(w_dtype), w2_ref[...], preferred_element_type=jnp.float32)
    o_ref[...] = (y + b2_ref[...]).astype(o_ref.dtype)


def _mlp_kernel_ktiled_accout(x_ref, w1_ref, b1_ref, w2_ref, b2_ref, o_ref, *, act):
    # Grid = (row tiles, hidden tiles).  f32 output is resident across the
    # hidden (reduction) axis, so we accumulate straight into o_ref (no scratch).
    k = pl.program_id(1)

    @pl.when(k == 0)
    def _init():
        o_ref[...] = jnp.zeros_like(o_ref)

    w_dtype = w1_ref.dtype
    x = x_ref[...].astype(w_dtype)                       # (tm, Dp)
    h = act(jnp.dot(x, w1_ref[...], preferred_element_type=jnp.float32) + b1_ref[...])
    o_ref[...] += jnp.dot(h.astype(w_dtype), w2_ref[...],
                          preferred_element_type=jnp.float32)

    @pl.when(k == pl.num_programs(1) - 1)
    def _finalize():
        o_ref[...] += b2_ref[...]


def _mlp_kernel_ktiled_scratch(x_ref, w1_ref, b1_ref, w2_ref, b2_ref, o_ref,
                               acc_ref, *, act):
    # Same as above but with an f32 scratch accumulator (narrow output dtypes).
    k = pl.program_id(1)

    @pl.when(k == 0)
    def _init():
        acc_ref[...] = jnp.zeros_like(acc_ref)

    w_dtype = w1_ref.dtype
    x = x_ref[...].astype(w_dtype)
    h = act(jnp.dot(x, w1_ref[...], preferred_element_type=jnp.float32) + b1_ref[...])
    acc_ref[...] += jnp.dot(h.astype(w_dtype), w2_ref[...],
                            preferred_element_type=jnp.float32)

    @pl.when(k == pl.num_programs(1) - 1)
    def _finalize():
        o_ref[...] = (acc_ref[...] + b2_ref[...]).astype(o_ref.dtype)


def _linear_kernel(x_ref, w_ref, b_ref, o_ref, acc_ref, *, act):
    # Standard (i, j, k)-tiled y = act(x @ Wt + b); epilogue at last k step.
    k = pl.program_id(2)

    @pl.when(k == 0)
    def _init():
        acc_ref[...] = jnp.zeros_like(acc_ref)

    acc_ref[...] += jnp.dot(x_ref[...].astype(w_ref.dtype), w_ref[...],
                            preferred_element_type=jnp.float32)

    @pl.when(k == pl.num_programs(2) - 1)
    def _finalize():
        o_ref[...] = act(acc_ref[...] + b_ref[...]).astype(o_ref.dtype)


# --------------------------- pallas_call wrappers ----------------------------


def _mlp_resident_call(x2d, w1t, b1, w2t, b2, *, act, tm, out_dtype, vmem_limit,
                       use_pm, x_buffers):
    M, Dp = x2d.shape
    grid = (_cdiv(M, tm),)

    def const_spec(shape):
        if use_pm and _HAS_PIPELINE_MODE:
            return pl.BlockSpec(shape, lambda i: (0, 0), pipeline_mode=pl.Buffered(1))
        return pl.BlockSpec(shape, lambda i: (0, 0))

    def stream_spec(shape):
        if (use_pm and _HAS_PIPELINE_MODE and x_buffers and x_buffers > 2
                and grid[0] >= x_buffers):
            return pl.BlockSpec(shape, lambda i: (i, 0),
                                pipeline_mode=pl.Buffered(x_buffers))
        return pl.BlockSpec(shape, lambda i: (i, 0))

    cost = pl.CostEstimate(
        flops=int(4 * M * Dp * Dp),
        transcendentals=0,
        bytes_accessed=int(M * Dp * (x2d.dtype.itemsize + jnp.zeros((), out_dtype).dtype.itemsize)
                           + 2 * Dp * Dp * w1t.dtype.itemsize + 2 * Dp * 4))

    return pl.pallas_call(
        functools.partial(_mlp_kernel_resident, act=act),
        out_shape=jax.ShapeDtypeStruct((M, Dp), out_dtype),
        grid_spec=pltpu.PrefetchScalarGridSpec(
            num_scalar_prefetch=0,
            grid=grid,
            in_specs=[
                stream_spec((tm, Dp)),        # x tile
                const_spec((Dp, Dp)),         # W1^T (resident)
                const_spec((1, Dp)),          # b1
                const_spec((Dp, Dp)),         # W2^T (resident)
                const_spec((1, Dp)),          # b2
            ],
            out_specs=pl.BlockSpec((tm, Dp), lambda i: (i, 0)),
        ),
        compiler_params=pltpu.CompilerParams(
            dimension_semantics=("parallel",),
            vmem_limit_bytes=int(vmem_limit)),
        cost_estimate=cost,
    )(x2d, w1t, b1, w2t, b2)


def _mlp_ktiled_call(x2d, w1t, b1, w2t, b2, *, act, tm, tk, out_dtype, vmem_limit,
                     use_pm):
    M, Dp = x2d.shape
    grid = (_cdiv(M, tm), Dp // tk)
    acc_in_out = jnp.zeros((), out_dtype).dtype == jnp.float32

    def const_spec(shape):
        if use_pm and _HAS_PIPELINE_MODE:
            return pl.BlockSpec(shape, lambda i, k: (0, 0),
                                pipeline_mode=pl.Buffered(1))
        return pl.BlockSpec(shape, lambda i, k: (0, 0))

    restream = grid[0]
    cost = pl.CostEstimate(
        flops=int(4 * M * Dp * Dp),
        transcendentals=0,
        bytes_accessed=int(M * Dp * (x2d.dtype.itemsize + jnp.zeros((), out_dtype).dtype.itemsize)
                           + restream * 2 * Dp * Dp * w1t.dtype.itemsize))

    kernel = (_mlp_kernel_ktiled_accout if acc_in_out else _mlp_kernel_ktiled_scratch)
    scratch = [] if acc_in_out else [pltpu.VMEM((tm, Dp), jnp.float32)]

    return pl.pallas_call(
        functools.partial(kernel, act=act),
        out_shape=jax.ShapeDtypeStruct((M, Dp), out_dtype),
        grid_spec=pltpu.PrefetchScalarGridSpec(
            num_scalar_prefetch=0,
            grid=grid,
            in_specs=[
                pl.BlockSpec((tm, Dp), lambda i, k: (i, 0)),   # x (resident across k)
                pl.BlockSpec((Dp, tk), lambda i, k: (0, k)),   # W1^T col tile
                pl.BlockSpec((1, tk), lambda i, k: (0, k)),    # b1 tile
                pl.BlockSpec((tk, Dp), lambda i, k: (k, 0)),   # W2^T row tile
                const_spec((1, Dp)),                           # b2
            ],
            out_specs=pl.BlockSpec((tm, Dp), lambda i, k: (i, 0)),
            scratch_shapes=scratch,
        ),
        compiler_params=pltpu.CompilerParams(
            dimension_semantics=("parallel", "arbitrary"),
            vmem_limit_bytes=int(vmem_limit)),
        cost_estimate=cost,
    )(x2d, w1t, b1, w2t, b2)


def _linear_call(x2d, wt, b, *, act, out_dtype, tm, tn, tk, vmem_limit):
    M, K = x2d.shape
    N = wt.shape[1]
    grid = (_cdiv(M, tm), N // tn, K // tk)

    cost = pl.CostEstimate(
        flops=int(2 * M * K * N),
        transcendentals=0,
        bytes_accessed=int(M * K * x2d.dtype.itemsize
                           + grid[0] * K * N * wt.dtype.itemsize
                           + M * N * jnp.zeros((), out_dtype).dtype.itemsize))

    return pl.pallas_call(
        functools.partial(_linear_kernel, act=act),
        out_shape=jax.ShapeDtypeStruct((M, N), out_dtype),
        grid_spec=pltpu.PrefetchScalarGridSpec(
            num_scalar_prefetch=0,
            grid=grid,
            in_specs=[
                pl.BlockSpec((tm, tk), lambda i, j, k: (i, k)),
                pl.BlockSpec((tk, tn), lambda i, j, k: (k, j)),
                pl.BlockSpec((1, tn), lambda i, j, k: (0, j)),
            ],
            out_specs=pl.BlockSpec((tm, tn), lambda i, j, k: (i, j)),
            scratch_shapes=[pltpu.VMEM((tm, tn), jnp.float32)],
        ),
        compiler_params=pltpu.CompilerParams(
            dimension_semantics=("parallel", "parallel", "arbitrary"),
            vmem_limit_bytes=int(vmem_limit)),
        cost_estimate=cost,
    )(x2d, wt, b)


# ------------------------------ public API -----------------------------------


def prepare_params(params, compute_dtype=jnp.bfloat16):
    """One-time weight prep: transpose to (in,out), cast (default bf16), pad to 128 lanes.

    params: fc1_w/fc2_w (out,in) and fc1_b/fc2_b (out,) in torch nn.Linear layout.
    Biases stay f32 (added onto the f32 accumulator in the epilogue).
    NOTE: bf16 weights/activations are an intentional precision change vs. the
    f32 PyTorch reference; pass compute_dtype=jnp.float32 for tight parity.
    """
    D = params["fc1_w"].shape[0]
    Dp = _round_up(D, 128)
    pad = Dp - D

    def prep_w(w):
        wt = jnp.asarray(w).T.astype(compute_dtype)          # (in, out)
        return jnp.pad(wt, ((0, pad), (0, pad)))

    def prep_b(b):
        return jnp.pad(jnp.asarray(b).astype(jnp.float32), (0, pad)).reshape(1, Dp)

    return {
        "w1t": prep_w(params["fc1_w"]),
        "b1": prep_b(params["fc1_b"]),
        "w2t": prep_w(params["fc2_w"]),
        "b2": prep_b(params["fc2_b"]),
    }


def mlp_forward(x, prepped, swap_axes=None, activation=_relu, out_dtype=None,
                force_hidden_tiling=False, force_split_matmuls=False,
                use_pipeline_modes=True, activation_is_elementwise=True):
    """Pallas equivalent of MLP.forward: optional swapaxes, fc1 -> act -> fc2, swap back."""
    if swap_axes:
        x = jnp.swapaxes(x, swap_axes[0], swap_axes[1])

    orig_shape = x.shape
    D = orig_shape[-1]
    Dp = prepped["w1t"].shape[0]
    out_dt = jax.dtypes.canonicalize_dtype(x.dtype if out_dtype is None else out_dtype)

    x2d = x.reshape(-1, D)
    M = int(x2d.shape[0])
    # Lane padding ONLY when the feature dim is not a multiple of 128 (weights
    # are zero-padded so pad lanes are inert); no host-side row pad/slice.
    if Dp != D:
        x2d = jnp.pad(x2d, ((0, 0), (0, Dp - D)))

    gen = _tpu_generation()
    capacity = _vmem_capacity_bytes(gen)
    budget = int(capacity * 0.85)

    w_itemsize = prepped["w1t"].dtype.itemsize
    x_itemsize = x2d.dtype.itemsize
    o_itemsize = out_dt.itemsize

    use_pm = use_pipeline_modes and _HAS_PIPELINE_MODE
    weight_buf = 1 if use_pm else 2

    def _align_tm(t):
        t = int(max(8, min(t, _round_up(M, 8))))
        big_align = 256 if gen in ("v6", "v7") else 128
        if t >= big_align:
            return (t // big_align) * big_align
        if t >= 16:
            return (t // 16) * 16
        return 8

    # ---------------- path selection -----------------------------------------
    resident_weight_bytes = 2 * Dp * Dp * w_itemsize * weight_buf

    def _ktiled_plan():
        tk = 128
        for cand in (512, 256):
            if Dp % cand == 0:
                tk = cand
                break
        acc_in_out = out_dt == jnp.float32
        out_row = Dp * 4 if acc_in_out else (2 * Dp * o_itemsize + Dp * 4)
        # x tile (double-buffered) + output/accumulator + f32 h & bf16 casts.
        per_row = (2 * Dp * x_itemsize + out_row
                   + 2 * tk * 4 + Dp * w_itemsize + 2 * tk * w_itemsize)
        fixed = (2 * 2 * Dp * tk * w_itemsize          # W1/W2 tiles, double-buffered
                 + 2 * 8 * tk * 4 + weight_buf * 8 * Dp * 4)
        tm_fit = max(8, (budget - fixed) // max(per_row, 1))
        tm = _align_tm(min(4096, tm_fit))
        return tk, tm, per_row, fixed

    if force_split_matmuls:
        path = "split"
    elif force_hidden_tiling:
        path = "ktiled"
        tk, tm, per_row, fixed = _ktiled_plan()
    elif resident_weight_bytes <= int(budget * 0.7):
        path = "resident"
    else:
        tk, tm, per_row, fixed = _ktiled_plan()
        # If both DxD weights would be re-streamed from HBM too many times,
        # fall back to two standard tiled matmuls instead of the fused kernel.
        path = "ktiled" if _cdiv(M, tm) <= 4 else "split"

    # ---------------- execution ----------------------------------------------
    if path == "resident":
        # per-row VMEM: x/out tiles (double-buffered) + f32 h/y temporaries
        # + bf16 cast copies the compiler materializes.
        per_row = (2 * Dp * x_itemsize + 2 * Dp * o_itemsize
                   + 2 * Dp * 4 + 2 * Dp * w_itemsize)
        fixed = resident_weight_bytes + 2 * weight_buf * 8 * Dp * 4
        target = 1024 if w_itemsize <= 2 else 512
        tm = _align_tm(min(target, max(8, (budget - fixed) // max(per_row, 1))))
        # v7x megacore: keep >=2 row blocks per TensorCore (>=4 total) so each
        # core still overlaps DMA/compute. Skip on single-TC v5e/v6e.
        if gen == "v7":
            want_blocks = 4
            if _cdiv(M, tm) < want_blocks and M >= want_blocks * 8:
                tm = max(8, ((M // want_blocks) // 8) * 8)
        # Small-D mem-bound shapes on v5e: deeper x pipeline hides HBM latency.
        x_buffers = 3 if (gen == "v5" and Dp <= 256) else None
        vmem_limit = min(capacity, fixed + tm * per_row + 16 * _MIB)
        y2d = _mlp_resident_call(
            x2d, prepped["w1t"], prepped["b1"], prepped["w2t"], prepped["b2"],
            act=activation, tm=tm, out_dtype=out_dt, vmem_limit=vmem_limit,
            use_pm=use_pm, x_buffers=x_buffers)

    elif path == "ktiled":
        if not activation_is_elementwise:
            raise ValueError("hidden-dim tiled path requires an elementwise activation")
        vmem_limit = min(capacity, fixed + tm * per_row + 16 * _MIB)
        y2d = _mlp_ktiled_call(
            x2d, prepped["w1t"], prepped["b1"], prepped["w2t"], prepped["b2"],
            act=activation, tm=tm, tk=tk, out_dtype=out_dt, vmem_limit=vmem_limit,
            use_pm=use_pm)

    else:  # "split": two standard (i, j, k)-tiled matmuls, bf16 intermediate h
        if not activation_is_elementwise:
            raise ValueError("split-matmul path requires an elementwise activation")
        tn = 128
        for cand in (512, 256):
            if Dp % cand == 0:
                tn = cand
                break
        tk = tn
        h_dtype = prepped["w1t"].dtype
        h_itemsize = h_dtype.itemsize
        per_row = (2 * tk * max(x_itemsize, h_itemsize)
                   + 2 * tn * max(o_itemsize, h_itemsize) + tn * 4)
        fixed = 2 * 2 * tk * tn * w_itemsize + 2 * 8 * tn * 4
        target = 1024 if w_itemsize <= 2 else 512
        tm = _align_tm(min(target, max(8, (budget - fixed) // max(per_row, 1))))
        vmem_limit = min(capacity, fixed + tm * per_row + 16 * _MIB)
        h2d = _linear_call(x2d, prepped["w1t"], prepped["b1"], act=activation,
                           out_dtype=h_dtype, tm=tm, tn=tn, tk=tk,
                           vmem_limit=vmem_limit)
        y2d = _linear_call(h2d, prepped["w2t"], prepped["b2"], act=lambda v: v,
                           out_dtype=out_dt, tm=tm, tn=tn, tk=tk,
                           vmem_limit=vmem_limit)

    if Dp != D:
        y2d = y2d[:, :D]
    y = y2d.reshape(orig_shape)
    if swap_axes:
        y = jnp.swapaxes(y, swap_axes[0], swap_axes[1])
    return y


def init_params(key, dim, dtype=jnp.float32):
    """Deterministic init matching nn.Linear shapes (U(-1/sqrt(dim), 1/sqrt(dim)))."""
    k1, k2, k3, k4 = jax.random.split(key, 4)
    bound = 1.0 / float(jnp.sqrt(dim))
    return {
        "fc1_w": jax.random.uniform(k1, (dim, dim), dtype, -bound, bound),
        "fc1_b": jax.random.uniform(k2, (dim,), dtype, -bound, bound),
        "fc2_w": jax.random.uniform(k3, (dim, dim), dtype, -bound, bound),
        "fc2_b": jax.random.uniform(k4, (dim,), dtype, -bound, bound),
    }


def _run(x, prepped, **kwargs):
    """jit + run; if pipeline_mode specs are rejected by this Pallas build, retry plain."""
    try:
        fn = jax.jit(functools.partial(mlp_forward, **kwargs))
        return jax.block_until_ready(fn(x, prepped))
    except Exception:
        fn = jax.jit(functools.partial(mlp_forward, use_pipeline_modes=False, **kwargs))
        return jax.block_until_ready(fn(x, prepped))


if __name__ == "__main__":
    key = jax.random.PRNGKey(0)
    kp, kx1, kx2, kx3, kx4 = jax.random.split(key, 5)

    # --- Test 1: dim=32, default bf16 weights, resident-weight path ------------
    dim = 32
    params = init_params(kp, dim)
    prepped = prepare_params(params)                         # bf16 weights (default)
    x = jax.random.normal(kx1, (2, 8, dim), jnp.float32)
    y = _run(x, prepped)
    w1 = params["fc1_w"].astype(jnp.bfloat16).astype(jnp.float32)
    w2 = params["fc2_w"].astype(jnp.bfloat16).astype(jnp.float32)
    h_ref = jnp.maximum(x @ w1.T + params["fc1_b"], 0.0)
    y_ref = h_ref @ w2.T + params["fc2_b"]
    assert y.shape == x.shape
    assert jnp.allclose(y, y_ref, atol=5e-2, rtol=5e-2), "test1 mismatch"

    # --- Test 2: swap_axes=(1,2) + ragged row count (partial last row block) ---
    x_sw = jax.random.normal(kx2, (3, dim, 5), jnp.float32)  # after swap: M=15 rows
    y_sw = _run(x_sw, prepped, swap_axes=(1, 2))
    xs = jnp.swapaxes(x_sw, 1, 2)
    h_ref2 = jnp.maximum(xs @ w1.T + params["fc1_b"], 0.0)
    y_ref_sw = jnp.swapaxes(h_ref2 @ w2.T + params["fc2_b"], 1, 2)
    assert y_sw.shape == x_sw.shape
    assert jnp.allclose(y_sw, y_ref_sw, atol=5e-2, rtol=5e-2), "test2 mismatch"

    # --- Test 3: f32 weights, forced hidden-dim tiled path (accumulate in o_ref)
    dim3 = 384  # Dp=384, tk=128 -> 3 reduction steps exercise the accumulator
    params3 = init_params(jax.random.fold_in(kp, 3), dim3)
    prepped3 = prepare_params(params3, compute_dtype=jnp.float32)
    x3 = jax.random.normal(kx3, (2, 8, dim3), jnp.float32)
    y3 = _run(x3, prepped3, force_hidden_tiling=True)
    h_ref3 = jnp.maximum(x3 @ params3["fc1_w"].T + params3["fc1_b"], 0.0)
    y_ref3 = h_ref3 @ params3["fc2_w"].T + params3["fc2_b"]
    assert y3.shape == x3.shape
    assert jnp.allclose(y3, y_ref3, atol=2e-2, rtol=2e-2), "test3 mismatch"

    # --- Test 4: forced split-matmul fallback, bf16 weights + bf16 output ------
    dim4 = 256
    params4 = init_params(jax.random.fold_in(kp, 4), dim4)
    prepped4 = prepare_params(params4)
    x4 = jax.random.normal(kx4, (4, 16, dim4), jnp.float32)
    y4 = _run(x4, prepped4, force_split_matmuls=True, out_dtype=jnp.bfloat16)
    w14 = params4["fc1_w"].astype(jnp.bfloat16).astype(jnp.float32)
    w24 = params4["fc2_w"].astype(jnp.bfloat16).astype(jnp.float32)
    h_ref4 = jnp.maximum(x4 @ w14.T + params4["fc1_b"], 0.0)
    y_ref4 = h_ref4 @ w24.T + params4["fc2_b"]
    assert y4.shape == x4.shape and y4.dtype == jnp.bfloat16
    assert jnp.allclose(y4.astype(jnp.float32), y_ref4, atol=1e-1, rtol=1e-1), "test4 mismatch"

    print("KERNEL_OK")
</pallas_src>

<mosaic_0001>
module attributes {stable_mosaic.version = 11 : i64} {
  func.func @_mlp_kernel_resident(%arg0: i32, %arg1: memref<16x128xf32, #tpu.memory_space<vmem>>, %arg2: memref<128x128xbf16, #tpu.memory_space<vmem>>, %arg3: memref<1x128xf32, #tpu.memory_space<vmem>>, %arg4: memref<128x128xbf16, #tpu.memory_space<vmem>>, %arg5: memref<1x128xf32, #tpu.memory_space<vmem>>, %arg6: memref<16x128xf32, #tpu.memory_space<vmem>>) attributes {dimension_semantics = [#tpu.dimension_semantics<parallel>], iteration_bounds = array<i64: 1>, scalar_prefetch = 0 : i64, scratch_operands = 0 : i64, tpu.core_type = #tpu.core_type<tc>, window_params = [{transform_indices = @transform_0, window_bounds = array<i64: 16, 128>}, {pipeline_mode = #tpu.pipeline_mode<synchronous>, transform_indices = @transform_1, window_bounds = array<i64: 128, 128>}, {pipeline_mode = #tpu.pipeline_mode<synchronous>, transform_indices = @transform_2, window_bounds = array<i64: 1, 128>}, {pipeline_mode = #tpu.pipeline_mode<synchronous>, transform_indices = @transform_3, window_bounds = array<i64: 128, 128>}, {pipeline_mode = #tpu.pipeline_mode<synchronous>, transform_indices = @transform_4, window_bounds = array<i64: 1, 128>}, {transform_indices = @transform_5, window_bounds = array<i64: 16, 128>}]} {
    %c0 = arith.constant 0 : index
    %c0_0 = arith.constant 0 : index
    %0 = vector.load %arg1[%c0, %c0_0] : memref<16x128xf32, #tpu.memory_space<vmem>>, vector<16x128xf32>
    %1 = arith.truncf %0 : vector<16x128xf32> to vector<16x128xbf16>
    %c0_1 = arith.constant 0 : index
    %c0_2 = arith.constant 0 : index
    %2 = vector.load %arg2[%c0_1, %c0_2] : memref<128x128xbf16, #tpu.memory_space<vmem>>, vector<128x128xbf16>
    %cst = arith.constant dense<0.000000e+00> : vector<16x128xf32>
    %3 = tpu.matmul %1, %2, %cst {dimension_numbers = #tpu.dot_dimension_numbers<[1], [0], [0], [1], [0, 0, 1, 1], [], []>} : vector<16x128xbf16>, vector<128x128xbf16>, vector<16x128xf32> -> vector<16x128xf32>
    %c0_3 = arith.constant 0 : index
    %c0_4 = arith.constant 0 : index
    %4 = vector.load %arg3[%c0_3, %c0_4] : memref<1x128xf32, #tpu.memory_space<vmem>>, vector<1x128xf32>
    %5 = vector.broadcast %4 : vector<1x128xf32> to vector<16x128xf32>
    %6 = arith.addf %3, %5 : vector<16x128xf32>
    %cst_5 = arith.constant 0.000000e+00 : f32
    %7 = vector.broadcast %cst_5 : f32 to vector<16x128xf32>
    %8 = arith.maximumf %6, %7 : vector<16x128xf32>
    %9 = arith.truncf %8 : vector<16x128xf32> to vector<16x128xbf16>
    %c0_6 = arith.constant 0 : index
    %c0_7 = arith.constant 0 : index
    %10 = vector.load %arg4[%c0_6, %c0_7] : memref<128x128xbf16, #tpu.memory_space<vmem>>, vector<128x128xbf16>
    %cst_8 = arith.constant dense<0.000000e+00> : vector<16x128xf32>
    %11 = tpu.matmul %9, %10, %cst_8 {dimension_numbers = #tpu.dot_dimension_numbers<[1], [0], [0], [1], [0, 0, 1, 1], [], []>} : vector<16x128xbf16>, vector<128x128xbf16>, vector<16x128xf32> -> vector<16x128xf32>
    %c0_9 = arith.constant 0 : index
    %c0_10 = arith.constant 0 : index
    %12 = vector.load %arg5[%c0_9, %c0_10] : memref<1x128xf32, #tpu.memory_space<vmem>>, vector<1x128xf32>
    %13 = vector.broadcast %12 : vector<1x128xf32> to vector<16x128xf32>
    %14 = arith.addf %11, %13 : vector<16x128xf32>
    %c0_11 = arith.constant 0 : index
    %c0_12 = arith.constant 0 : index
    %15 = vector.load %arg6[%c0_11, %c0_12] : memref<16x128xf32, #tpu.memory_space<vmem>>, vector<16x128xf32>
    tpu.vector_store %arg6[%c0_11, %c0_12], %14 {strides = array<i32>} : memref<16x128xf32, #tpu.memory_space<vmem>>, vector<16x128xf32>,
    return
  }
  func.func @transform_0(%arg0: i32) -> (i32, i32) {
    %c0_i32 = arith.constant 0 : i32
    %c0_i32_0 = arith.constant 0 : i32
    return %arg0, %c0_i32 : i32, i32
  }
  func.func @transform_1(%arg0: i32) -> (i32, i32) {
    %c0_i32 = arith.constant 0 : i32
    %c0_i32_0 = arith.constant 0 : i32
    %c0_i32_1 = arith.constant 0 : i32
    return %c0_i32, %c0_i32_0 : i32, i32
  }
  func.func @transform_2(%arg0: i32) -> (i32, i32) {
    %c0_i32 = arith.constant 0 : i32
    %c0_i32_0 = arith.constant 0 : i32
    %c0_i32_1 = arith.constant 0 : i32
    return %c0_i32, %c0_i32_0 : i32, i32
  }
  func.func @transform_3(%arg0: i32) -> (i32, i32) {
    %c0_i32 = arith.constant 0 : i32
    %c0_i32_0 = arith.constant 0 : i32
    %c0_i32_1 = arith.constant 0 : i32
    return %c0_i32, %c0_i32_0 : i32, i32
  }
  func.func @transform_4(%arg0: i32) -> (i32, i32) {
    %c0_i32 = arith.constant 0 : i32
    %c0_i32_0 = arith.constant 0 : i32
    %c0_i32_1 = arith.constant 0 : i32
    return %c0_i32, %c0_i32_0 : i32, i32
  }
  func.func @transform_5(%arg0: i32) -> (i32, i32) {
    %c0_i32 = arith.constant 0 : i32
    %c0_i32_0 = arith.constant 0 : i32
    return %arg0, %c0_i32 : i32, i32
  }
}

module attributes {stable_mosaic.version = 11 : i64} {
  func.func @_mlp_kernel_resident(%arg0: i32, %arg1: memref<16x128xf32, #tpu.memory_space<vmem>>, %arg2: memref<128x128xbf16, #tpu.memory_space<vmem>>, %arg3: memref<1x128xf32, #tpu.memory_space<vmem>>, %arg4: memref<128x128xbf16, #tpu.memory_space<vmem>>, %arg5: memref<1x128xf32, #tpu.memory_space<vmem>>, %arg6: memref<16x128xf32, #tpu.memory_space<vmem>>) attributes {dimension_semantics = [#tpu.dimension_semantics<parallel>], iteration_bounds = array<i64: 1>, scalar_prefetch = 0 : i64, scratch_operands = 0 : i64, tpu.core_type = #tpu.core_type<tc>, window_params = [{transform_indices = @transform_0, window_bounds = array<i64: 16, 128>}, {pipeline_mode = #tpu.pipeline_mode<synchronous>, transform_indices = @transform_1, window_bounds = array<i64: 128, 128>}, {pipeline_mode = #tpu.pipeline_mode<synchronous>, transform_indices = @transform_2, window_bounds = array<i64: 1, 128>}, {pipeline_mode = #tpu.pipeline_mode<synchronous>, transform_indices = @transform_3, window_bounds = array<i64: 128, 128>}, {pipeline_mode = #tpu.pipeline_mode<synchronous>, transform_indices = @transform_4, window_bounds = array<i64: 1, 128>}, {transform_indices = @transform_5, window_bounds = array<i64: 16, 128>}]} {
    %c0 = arith.constant 0 : index
    %c0_0 = arith.constant 0 : index
    %0 = vector.load %arg1[%c0, %c0_0] : memref<16x128xf32, #tpu.memory_space<vmem>>, vector<16x128xf32>
    %1 = arith.truncf %0 : vector<16x128xf32> to vector<16x128xbf16>
    %c0_1 = arith.constant 0 : index
    %c0_2 = arith.constant 0 : index
    %2 = vector.load %arg2[%c0_1, %c0_2] : memref<128x128xbf16, #tpu.memory_space<vmem>>, vector<128x128xbf16>
    %cst = arith.constant dense<0.000000e+00> : vector<16x128xf32>
    %3 = tpu.matmul %1, %2, %cst {dimension_numbers = #tpu.dot_dimension_numbers<[1], [0], [0], [1], [0, 0, 1, 1], [], []>} : vector<16x128xbf16>, vector<128x128xbf16>, vector<16x128xf32> -> vector<16x128xf32>
    %c0_3 = arith.constant 0 : index
    %c0_4 = arith.constant 0 : index
    %4 = vector.load %arg3[%c0_3, %c0_4] : memref<1x128xf32, #tpu.memory_space<vmem>>, vector<1x128xf32>
    %5 = vector.broadcast %4 : vector<1x128xf32> to vector<16x128xf32>
    %6 = arith.addf %3, %5 : vector<16x128xf32>
    %cst_5 = arith.constant 0.000000e+00 : f32
    %7 = vector.broadcast %cst_5 : f32 to vector<16x128xf32>
    %8 = arith.maximumf %6, %7 : vector<16x128xf32>
    %9 = arith.truncf %8 : vector<16x128xf32> to vector<16x128xbf16>
    %c0_6 = arith.constant 0 : index
    %c0_7 = arith.constant 0 : index
    %10 = vector.load %arg4[%c0_6, %c0_7] : memref<128x128xbf16, #tpu.memory_space<vmem>>, vector<128x128xbf16>
    %cst_8 = arith.constant dense<0.000000e+00> : vector<16x128xf32>
    %11 = tpu.matmul %9, %10, %cst_8 {dimension_numbers = #tpu.dot_dimension_numbers<[1], [0], [0], [1], [0, 0, 1, 1], [], []>} : vector<16x128xbf16>, vector<128x128xbf16>, vector<16x128xf32> -> vector<16x128xf32>
    %c0_9 = arith.constant 0 : index
    %c0_10 = arith.constant 0 : index
    %12 = vector.load %arg5[%c0_9, %c0_10] : memref<1x128xf32, #tpu.memory_space<vmem>>, vector<1x128xf32>
    %13 = vector.broadcast %12 : vector<1x128xf32> to vector<16x128xf32>
    %14 = arith.addf %11, %13 : vector<16x128xf32>
    %c0_11 = arith.constant 0 : index
    %c0_12 = arith.constant 0 : index
    %15 = vector.load %arg6[%c0_11, %c0_12] : memref<16x128xf32, #tpu.memory_space<vmem>>, vector<16x128xf32>
    tpu.vector_store %arg6[%c0_11, %c0_12], %14 {strides = array<i32>} : memref<16x128xf32, #tpu.memory_space<vmem>>, vector<16x128xf32>,
    return
  }
  func.func @transform_0(%arg0: i32) -> (i32, i32) {
    %c0_i32 = arith.constant 0 : i32
    %c0_i32_0 = arith.constant 0 : i32
    return %arg0, %c0_i32 : i32, i32
  }
  func.func @transform_1(%arg0: i32) -> (i32, i32) {
    %c0_i32 = arith.constant 0 : i32
    %c0_i32_0 = arith.constant 0 : i32
    %c0_i32_1 = arith.constant 0 : i32
    return %c0_i32, %c0_i32_0 : i32, i32
  }
  func.func @transform_2(%arg0: i32) -> (i32, i32) {
    %c0_i32 = arith.constant 0 : i32
    %c0_i32_0 = arith.constant 0 : i32
    %c0_i32_1 = arith.constant 0 : i32
    return %c0_i32, %c0_i32_0 : i32, i32
  }
  func.func @transform_3(%arg0: i32) -> (i32, i32) {
    %c0_i32 = arith.constant 0 : i32
    %c0_i32_0 = arith.constant 0 : i32
    %c0_i32_1 = arith.constant 0 : i32
    return %c0_i32, %c0_i32_0 : i32, i32
  }
  func.func @transform_4(%arg0: i32) -> (i32, i32) {
    %c0_i32 = arith.constant 0 : i32
    %c0_i32_0 = arith.constant 0 : i32
    %c0_i32_1 = arith.constant 0 : i32
    return %c0_i32, %c0_i32_0 : i32, i32
  }
  func.func @transform_5(%arg0: i32) -> (i32, i32) {
    %c0_i32 = arith.constant 0 : i32
    %c0_i32_0 = arith.constant 0 : i32
    return %arg0, %c0_i32 : i32, i32
  }
}

</mosaic_0001>

<llo_original>
// kernel: mlp_forward.1
$region0: #{mlp_forward.1}
  #allocation0 [shape = 'u32[]', space=smem, size = 0x4, offset = 0x4, fixed_abs, tag = 'smem constant byte address 0x4 - core index']
  #allocation1 [shape = 'u32[72,128]{1,0:T(1,128)}', space=vmem, size = 0x9000, scoped, tag = 'internal scratch']
  %s0 = inlined_call_operand.vmem [shape: f32[16,128], index: 0, kind: input, shape index: {}]
  %s1 = inlined_call_operand.hbm [shape: bf16[128,128], index: 1, kind: input, shape index: {}]
  %s2 = inlined_call_operand.vmem [shape: f32[1,128], index: 2, kind: input, shape index: {}]
  %s3 = inlined_call_operand.hbm [shape: bf16[128,128], index: 3, kind: input, shape index: {}]
  %s4 = inlined_call_operand.vmem [shape: f32[1,128], index: 4, kind: input, shape index: {}]
  %s5 = inlined_call_operand.vmem [shape: f32[16,128], index: 5, kind: output, shape index: {}]
  %s6 = sld [smem:[#allocation0]]
  $region38: #{mlp_forward.1} parent=0
    _
  %s8 = ssub.s32 1, %s6
  %s9 = scalar_select 0, %s8, %s6
  $region1: #{mlp_forward.1} parent=0
    #allocation2 [shape = 'u8[32768]{0}', space=vmem, size = 0x8000, scoped, tag = 'input window, operand 1, single buffered']
    #allocation3 [shape = 's32[1]{0}', space=sflag, size = 0x4, scoped, tag = 'scoped memory for mlp_forward.1']
    #allocation4 [shape = 'u8[32768]{0}', space=vmem, size = 0x8000, scoped, tag = 'input window, operand 3, single buffered']
    #allocation5 [shape = 's32[1]{0}', space=sflag, size = 0x4, scoped, tag = 'scoped memory for mlp_forward.1']
    %10 = vsyncpa [#allocation3], 0
    %11 = vsyncpa [#allocation5], 0
    // Predicated region
    $region2: #{mlp_forward.1} parent=1 // pred_check
      _
    $region3: #{mlp_forward.1} parent=1 // pred_check_branch
      %13 = sbr.rel (0) target = $region5
    $region4: #{mlp_forward.1} parent=1 // pred_region
      _
    $region5: #{mlp_forward.1} parent=1 // pred_fallthru
      _
    // Predicated region
    $region6: #{mlp_forward.1} parent=1 // pred_check
      _
    $region7: #{mlp_forward.1} parent=1 // pred_check_branch
      %15 = sbr.rel (0) target = $region9
    $region8: #{mlp_forward.1} parent=1 // pred_region
      %17 = vsyncadd [#allocation3], 0
      %s18 = sshll.u32 %s1, 4
      %s19 = int_to_ptr.hbm [resolvable:$true] %s18
      %s20 = sshll.u32 [#allocation2], 4
      %s21 = int_to_ptr.vmem [resolvable:$true] %s20
      %26 = dma.hbm_to_vmem [thread:$0]  %s19, 1024, %s21, [#allocation3], 64, 64, 4
    $region9: #{mlp_forward.1} parent=1 // pred_fallthru
      _
    // Predicated region
    $region10: #{mlp_forward.1} parent=1 // pred_check
      _
    $region11: #{mlp_forward.1} parent=1 // pred_check_branch
      %28 = sbr.rel (0) target = $region13
    $region12: #{mlp_forward.1} parent=1 // pred_region
      _
    $region13: #{mlp_forward.1} parent=1 // pred_fallthru
      _
    // Predicated region
    $region14: #{mlp_forward.1} parent=1 // pred_check
      _
    $region15: #{mlp_forward.1} parent=1 // pred_check_branch
      %30 = sbr.rel (0) target = $region17
    $region16: #{mlp_forward.1} parent=1 // pred_region
      %32 = vsyncadd [#allocation5], 0
      %s33 = sshll.u32 %s3, 4
      %s34 = int_to_ptr.hbm [resolvable:$true] %s33
      %s35 = sshll.u32 [#allocation4], 4
      %s36 = int_to_ptr.vmem [resolvable:$true] %s35
      %41 = dma.hbm_to_vmem [thread:$0]  %s34, 1024, %s36, [#allocation5], 64, 64, 4
    $region17: #{mlp_forward.1} parent=1 // pred_fallthru
      _
    // Predicated region
    $region18: #{mlp_forward.1} parent=1 // pred_check
      _
    $region19: #{mlp_forward.1} parent=1 // pred_check_branch
      %43 = sbr.rel (0) target = $region21
    $region20: #{mlp_forward.1} parent=1 // pred_region
      _
    $region21: #{mlp_forward.1} parent=1 // pred_fallthru
      _
    // Predicated region
    $region22: #{mlp_forward.1} parent=1 // pred_check
      _
    $region23: #{mlp_forward.1} parent=1 // pred_check_branch
      %45 = sbr.rel (0) target = $region25
    $region24: #{mlp_forward.1} parent=1 // pred_region
      %47 = dma.done [#allocation3], 1024
    $region25: #{mlp_forward.1} parent=1 // pred_fallthru
      _
    // Predicated region
    $region26: #{mlp_forward.1} parent=1 // pred_check
      _
    $region27: #{mlp_forward.1} parent=1 // pred_check_branch
      %49 = sbr.rel (0) target = $region29
    $region28: #{mlp_forward.1} parent=1 // pred_region
      %51 = dma.done [#allocation5], 1024
    $region29: #{mlp_forward.1} parent=1 // pred_fallthru
      _
    %v52 = vld [vmem:[%s0] sm:$0xff]
    %v53 = vld [vmem:[%s0 + $0x8] sm:$0xff]
    %v54 = vpack.c.bf16 %v53, %v52
    %v55 = vld [vmem:[#allocation2] sm:$0xf]
    %v56 = vld [vmem:[#allocation2 + $0x4] sm:$0xf]
    %v57 = vld [vmem:[#allocation2 + $0x8] sm:$0xf]
    %v58 = vld [vmem:[#allocation2 + $0xc] sm:$0xf]
    %v59 = vld [vmem:[#allocation2 + $0x10] sm:$0xf]
    %v60 = vld [vmem:[#allocation2 + $0x14] sm:$0xf]
    %v61 = vld [vmem:[#allocation2 + $0x18] sm:$0xf]
    %v62 = vld [vmem:[#allocation2 + $0x1c] sm:$0xf]
    %v63 = vld [vmem:[#allocation2 + $0x20] sm:$0xf]
    %v64 = vld [vmem:[#allocation2 + $0x24] sm:$0xf]
    %v65 = vld [vmem:[#allocation2 + $0x28] sm:$0xf]
    %v66 = vld [vmem:[#allocation2 + $0x2c] sm:$0xf]
    %v67 = vld [vmem:[#allocation2 + $0x30] sm:$0xf]
    %v68 = vld [vmem:[#allocation2 + $0x34] sm:$0xf]
    %v69 = vld [vmem:[#allocation2 + $0x38] sm:$0xf]
    %v70 = vld [vmem:[#allocation2 + $0x3c] sm:$0xf]
    %v71 = vld [vmem:[%s2] sm:$0x1]
    %v73 = vperm.slane %v71, 0
    %v91 = vunpack.c.l.b16 %v55
    %v92 = vunpack.c.l.b16 %v56
    %v93 = vunpack.c.l.b16 %v57
    %v94 = vunpack.c.l.b16 %v58
    %v95 = vunpack.c.l.b16 %v59
    %v96 = vunpack.c.l.b16 %v60
    %v97 = vunpack.c.l.b16 %v61
    %v98 = vunpack.c.l.b16 %v62
    %v99 = vunpack.c.l.b16 %v63
    %v100 = vunpack.c.l.b16 %v64
    %v101 = vunpack.c.l.b16 %v65
    %v102 = vunpack.c.l.b16 %v66
    %v103 = vunpack.c.l.b16 %v67
    %v104 = vunpack.c.l.b16 %v68
    %v105 = vunpack.c.l.b16 %v69
    %v106 = vunpack.c.l.b16 %v70
    %v107 = vpack.c.b16 %v92, %v91
    %v108 = vpack.c.b16 %v94, %v93
    %v109 = vpack.c.b16 %v96, %v95
    %v110 = vpack.c.b16 %v98, %v97
    %v111 = vpack.c.b16 %v100, %v99
    %v112 = vpack.c.b16 %v102, %v101
    %v113 = vpack.c.b16 %v104, %v103
    %v114 = vpack.c.b16 %v106, %v105
    %123 = vmatpush.bf16.msra.mxu0 %v114
    %124 = vmatpush.bf16.msra.mxu0 %v113
    %125 = vmatpush.bf16.msra.mxu0 %v112
    %126 = vmatpush.bf16.msra.mxu0 %v111
    %127 = vmatpush.bf16.msra.mxu0 %v110
    %128 = vmatpush.bf16.msra.mxu0 %v109
    %129 = vmatpush.bf16.msra.mxu0 %v108
    %130 = vmatpush.bf16.msra.mxu0 %v107
    %131 = vmatmul.bf16.gmra.mxu0 %v54
    %v132 = vpop.f32.mrf.mxu0
    %v133 = vadd.f32 %v73, %v132
    %v134 = vpop.f32.mrf.mxu0
    %v135 = vadd.f32 %v73, %v134
    %136 = vdwg.mxu0
    %v137 = vmax.f32 %v133, 0.0
    %v138 = vmax.f32 %v135, 0.0
    %v139 = vpack.c.bf16 %v138, %v137
    %v140 = vld [vmem:[#allocation4] sm:$0xf]
    %v141 = vld [vmem:[#allocation4 + $0x4] sm:$0xf]
    %v142 = vld [vmem:[#allocation4 + $0x8] sm:$0xf]
    %v143 = vld [vmem:[#allocation4 + $0xc] sm:$0xf]
    %v144 = vld [vmem:[#allocation4 + $0x10] sm:$0xf]
    %v145 = vld [vmem:[#allocation4 + $0x14] sm:$0xf]
    %v146 = vld [vmem:[#allocation4 + $0x18] sm:$0xf]
    %v147 = vld [vmem:[#allocation4 + $0x1c] sm:$0xf]
    %v148 = vld [vmem:[#allocation4 + $0x20] sm:$0xf]
    %v149 = vld [vmem:[#allocation4 + $0x24] sm:$0xf]
    %v150 = vld [vmem:[#allocation4 + $0x28] sm:$0xf]
    %v151 = vld [vmem:[#allocation4 + $0x2c] sm:$0xf]
    %v152 = vld [vmem:[#allocation4 + $0x30] sm:$0xf]
    %v153 = vld [vmem:[#allocation4 + $0x34] sm:$0xf]
    %v154 = vld [vmem:[#allocation4 + $0x38] sm:$0xf]
    %v155 = vld [vmem:[#allocation4 + $0x3c] sm:$0xf]
    %v156 = vld [vmem:[%s4] sm:$0x1]
    %v158 = vperm.slane %v156, 0
    %v176 = vunpack.c.l.b16 %v140
    %v177 = vunpack.c.l.b16 %v141
    %v178 = vunpack.c.l.b16 %v142
    %v179 = vunpack.c.l.b16 %v143
    %v180 = vunpack.c.l.b16 %v144
    %v181 = vunpack.c.l.b16 %v145
    %v182 = vunpack.c.l.b16 %v146
    %v183 = vunpack.c.l.b16 %v147
    %v184 = vunpack.c.l.b16 %v148
    %v185 = vunpack.c.l.b16 %v149
    %v186 = vunpack.c.l.b16 %v150
    %v187 = vunpack.c.l.b16 %v151
    %v188 = vunpack.c.l.b16 %v152
    %v189 = vunpack.c.l.b16 %v153
    %v190 = vunpack.c.l.b16 %v154
    %v191 = vunpack.c.l.b16 %v155
    %v192 = vpack.c.b16 %v177, %v176
    %v193 = vpack.c.b16 %v179, %v178
    %v194 = vpack.c.b16 %v181, %v180
    %v195 = vpack.c.b16 %v183, %v182
    %v196 = vpack.c.b16 %v185, %v184
    %v197 = vpack.c.b16 %v187, %v186
    %v198 = vpack.c.b16 %v189, %v188
    %v199 = vpack.c.b16 %v191, %v190
    %208 = vmatpush.bf16.msra.mxu0 %v199
    %209 = vmatpush.bf16.msra.mxu0 %v198
    %210 = vmatpush.bf16.msra.mxu0 %v197
    %211 = vmatpush.bf16.msra.mxu0 %v196
    %212 = vmatpush.bf16.msra.mxu0 %v195
    %213 = vmatpush.bf16.msra.mxu0 %v194
    %214 = vmatpush.bf16.msra.mxu0 %v193
    %215 = vmatpush.bf16.msra.mxu0 %v192
    %216 = vmatmul.bf16.gmra.mxu0 %v139
    %v217 = vpop.f32.mrf.mxu0
    %v218 = vadd.f32 %v158, %v217
    %v219 = vpop.f32.mrf.mxu0
    %v220 = vadd.f32 %v158, %v219
    %221 = vdwg.mxu0
    %222 = vst [vmem:[%s5] sm:$0xff] %v218
    %223 = vst [vmem:[%s5 + $0x8] sm:$0xff] %v220
    // Predicated region
    $region30: #{mlp_forward.1} parent=1 // pred_check
      _
    $region31: #{mlp_forward.1} parent=1 // pred_check_branch
      %225 = sbr.rel (0) target = $region33
    $region32: #{mlp_forward.1} parent=1 // pred_region
      _
    $region33: #{mlp_forward.1} parent=1 // pred_fallthru
      _
    // Predicated region
    $region34: #{mlp_forward.1} parent=1 // pred_check
      _
    $region35: #{mlp_forward.1} parent=1 // pred_check_branch
      %227 = sbr.rel (0) target = $region37
    $region36: #{mlp_forward.1} parent=1 // pred_region
      _
    $region37: #{mlp_forward.1} parent=1 // pred_fallthru
      _
    %228 = vsyncpa [#allocation3], 1
    %229 = vsyncpa [#allocation5], 1

// kernel: mlp_forward.1
$region0: #{mlp_forward.1}
  #allocation0 [shape = 'u32[]', space=smem, size = 0x4, offset = 0x4, fixed_abs, tag = 'smem constant byte address 0x4 - core index']
  #allocation1 [shape = 'u32[72,128]{1,0:T(1,128)}', space=vmem, size = 0x9000, scoped, tag = 'internal scratch']
  %s0 = inlined_call_operand.vmem [shape: f32[16,128], index: 0, kind: input, shape index: {}]
  %s1 = inlined_call_operand.hbm [shape: bf16[128,128], index: 1, kind: input, shape index: {}]
  %s2 = inlined_call_operand.vmem [shape: f32[1,128], index: 2, kind: input, shape index: {}]
  %s3 = inlined_call_operand.hbm [shape: bf16[128,128], index: 3, kind: input, shape index: {}]
  %s4 = inlined_call_operand.vmem [shape: f32[1,128], index: 4, kind: input, shape index: {}]
  %s5 = inlined_call_operand.vmem [shape: f32[16,128], index: 5, kind: output, shape index: {}]
  %s6 = sld [smem:[#allocation0]]
  $region38: #{mlp_forward.1} parent=0
    _
  %s8 = ssub.s32 1, %s6
  %s9 = scalar_select 0, %s8, %s6
  $region1: #{mlp_forward.1} parent=0
    #allocation2 [shape = 'u8[32768]{0}', space=vmem, size = 0x8000, scoped, tag = 'input window, operand 1, single buffered']
    #allocation3 [shape = 's32[1]{0}', space=sflag, size = 0x4, scoped, tag = 'scoped memory for mlp_forward.1']
    #allocation4 [shape = 'u8[32768]{0}', space=vmem, size = 0x8000, scoped, tag = 'input window, operand 3, single buffered']
    #allocation5 [shape = 's32[1]{0}', space=sflag, size = 0x4, scoped, tag = 'scoped memory for mlp_forward.1']
    %10 = vsyncpa [#allocation3], 0
    %11 = vsyncpa [#allocation5], 0
    // Predicated region
    $region2: #{mlp_forward.1} parent=1 // pred_check
      _
    $region3: #{mlp_forward.1} parent=1 // pred_check_branch
      %13 = sbr.rel (0) target = $region5
    $region4: #{mlp_forward.1} parent=1 // pred_region
      _
    $region5: #{mlp_forward.1} parent=1 // pred_fallthru
      _
    // Predicated region
    $region6: #{mlp_forward.1} parent=1 // pred_check
      _
    $region7: #{mlp_forward.1} parent=1 // pred_check_branch
      %15 = sbr.rel (0) target = $region9
    $region8: #{mlp_forward.1} parent=1 // pred_region
      %17 = vsyncadd [#allocation3], 0
      %s18 = sshll.u32 %s1, 4
      %s19 = int_to_ptr.hbm [resolvable:$true] %s18
      %s20 = sshll.u32 [#allocation2], 4
      %s21 = int_to_ptr.vmem [resolvable:$true] %s20
      %26 = dma.hbm_to_vmem [thread:$0]  %s19, 1024, %s21, [#allocation3], 64, 64, 4
    $region9: #{mlp_forward.1} parent=1 // pred_fallthru
      _
    // Predicated region
    $region10: #{mlp_forward.1} parent=1 // pred_check
      _
    $region11: #{mlp_forward.1} parent=1 // pred_check_branch
      %28 = sbr.rel (0) target = $region13
    $region12: #{mlp_forward.1} parent=1 // pred_region
      _
    $region13: #{mlp_forward.1} parent=1 // pred_fallthru
      _
    // Predicated region
    $region14: #{mlp_forward.1} parent=1 // pred_check
      _
    $region15: #{mlp_forward.1} parent=1 // pred_check_branch
      %30 = sbr.rel (0) target = $region17
    $region16: #{mlp_forward.1} parent=1 // pred_region
      %32 = vsyncadd [#allocation5], 0
      %s33 = sshll.u32 %s3, 4
      %s34 = int_to_ptr.hbm [resolvable:$true] %s33
      %s35 = sshll.u32 [#allocation4], 4
      %s36 = int_to_ptr.vmem [resolvable:$true] %s35
      %41 = dma.hbm_to_vmem [thread:$0]  %s34, 1024, %s36, [#allocation5], 64, 64, 4
    $region17: #{mlp_forward.1} parent=1 // pred_fallthru
      _
    // Predicated region
    $region18: #{mlp_forward.1} parent=1 // pred_check
      _
    $region19: #{mlp_forward.1} parent=1 // pred_check_branch
      %43 = sbr.rel (0) target = $region21
    $region20: #{mlp_forward.1} parent=1 // pred_region
      _
    $region21: #{mlp_forward.1} parent=1 // pred_fallthru
      _
    // Predicated region
    $region22: #{mlp_forward.1} parent=1 // pred_check
      _
    $region23: #{mlp_forward.1} parent=1 // pred_check_branch
      %45 = sbr.rel (0) target = $region25
    $region24: #{mlp_forward.1} parent=1 // pred_region
      %47 = dma.done [#allocation3], 1024
    $region25: #{mlp_forward.1} parent=1 // pred_fallthru
      _
    // Predicated region
    $region26: #{mlp_forward.1} parent=1 // pred_check
      _
    $region27: #{mlp_forward.1} parent=1 // pred_check_branch
      %49 = sbr.rel (0) target = $region29
    $region28: #{mlp_forward.1} parent=1 // pred_region
      %51 = dma.done [#allocation5], 1024
    $region29: #{mlp_forward.1} parent=1 // pred_fallthru
      _
    %v52 = vld [vmem:[%s0] sm:$0xff]
    %v53 = vld [vmem:[%s0 + $0x8] sm:$0xff]
    %v54 = vpack.c.bf16 %v53, %v52
    %v55 = vld [vmem:[#allocation2] sm:$0xf]
    %v56 = vld [vmem:[#allocation2 + $0x4] sm:$0xf]
    %v57 = vld [vmem:[#allocation2 + $0x8] sm:$0xf]
    %v58 = vld [vmem:[#allocation2 + $0xc] sm:$0xf]
    %v59 = vld [vmem:[#allocation2 + $0x10] sm:$0xf]
    %v60 = vld [vmem:[#allocation2 + $0x14] sm:$0xf]
    %v61 = vld [vmem:[#allocation2 + $0x18] sm:$0xf]
    %v62 = vld [vmem:[#allocation2 + $0x1c] sm:$0xf]
    %v63 = vld [vmem:[#allocation2 + $0x20] sm:$0xf]
    %v64 = vld [vmem:[#allocation2 + $0x24] sm:$0xf]
    %v65 = vld [vmem:[#allocation2 + $0x28] sm:$0xf]
    %v66 = vld [vmem:[#allocation2 + $0x2c] sm:$0xf]
    %v67 = vld [vmem:[#allocation2 + $0x30] sm:$0xf]
    %v68 = vld [vmem:[#allocation2 + $0x34] sm:$0xf]
    %v69 = vld [vmem:[#allocation2 + $0x38] sm:$0xf]
    %v70 = vld [vmem:[#allocation2 + $0x3c] sm:$0xf]
    %v71 = vld [vmem:[%s2] sm:$0x1]
    %v73 = vperm.slane %v71, 0
    %v91 = vunpack.c.l.b16 %v55
    %v92 = vunpack.c.l.b16 %v56
    %v93 = vunpack.c.l.b16 %v57
    %v94 = vunpack.c.l.b16 %v58
    %v95 = vunpack.c.l.b16 %v59
    %v96 = vunpack.c.l.b16 %v60
    %v97 = vunpack.c.l.b16 %v61
    %v98 = vunpack.c.l.b16 %v62
    %v99 = vunpack.c.l.b16 %v63
    %v100 = vunpack.c.l.b16 %v64
    %v101 = vunpack.c.l.b16 %v65
    %v102 = vunpack.c.l.b16 %v66
    %v103 = vunpack.c.l.b16 %v67
    %v104 = vunpack.c.l.b16 %v68
    %v105 = vunpack.c.l.b16 %v69
    %v106 = vunpack.c.l.b16 %v70
    %v107 = vpack.c.b16 %v92, %v91
    %v108 = vpack.c.b16 %v94, %v93
    %v109 = vpack.c.b16 %v96, %v95
    %v110 = vpack.c.b16 %v98, %v97
    %v111 = vpack.c.b16 %v100, %v99
    %v112 = vpack.c.b16 %v102, %v101
    %v113 = vpack.c.b16 %v104, %v103
    %v114 = vpack.c.b16 %v106, %v105
    %123 = vmatpush.bf16.msra.mxu0 %v114
    %124 = vmatpush.bf16.msra.mxu0 %v113
    %125 = vmatpush.bf16.msra.mxu0 %v112
    %126 = vmatpush.bf16.msra.mxu0 %v111
    %127 = vmatpush.bf16.msra.mxu0 %v110
    %128 = vmatpush.bf16.msra.mxu0 %v109
    %129 = vmatpush.bf16.msra.mxu0 %v108
    %130 = vmatpush.bf16.msra.mxu0 %v107
    %131 = vmatmul.bf16.gmra.mxu0 %v54
    %v132 = vpop.f32.mrf.mxu0
    %v133 = vadd.f32 %v73, %v132
    %v134 = vpop.f32.mrf.mxu0
    %v135 = vadd.f32 %v73, %v134
    %136 = vdwg.mxu0
    %v137 = vmax.f32 %v133, 0.0
    %v138 = vmax.f32 %v135, 0.0
    %v139 = vpack.c.bf16 %v138, %v137
    %v140 = vld [vmem:[#allocation4] sm:$0xf]
    %v141 = vld [vmem:[#allocation4 + $0x4] sm:$0xf]
    %v142 = vld [vmem:[#allocation4 + $0x8] sm:$0xf]
    %v143 = vld [vmem:[#allocation4 + $0xc] sm:$0xf]
    %v144 = vld [vmem:[#allocation4 + $0x10] sm:$0xf]
    %v145 = vld [vmem:[#allocation4 + $0x14] sm:$0xf]
    %v146 = vld [vmem:[#allocation4 + $0x18] sm:$0xf]
    %v147 = vld [vmem:[#allocation4 + $0x1c] sm:$0xf]
    %v148 = vld [vmem:[#allocation4 + $0x20] sm:$0xf]
    %v149 = vld [vmem:[#allocation4 + $0x24] sm:$0xf]
    %v150 = vld [vmem:[#allocation4 + $0x28] sm:$0xf]
    %v151 = vld [vmem:[#allocation4 + $0x2c] sm:$0xf]
    %v152 = vld [vmem:[#allocation4 + $0x30] sm:$0xf]
    %v153 = vld [vmem:[#allocation4 + $0x34] sm:$0xf]
    %v154 = vld [vmem:[#allocation4 + $0x38] sm:$0xf]
    %v155 = vld [vmem:[#allocation4 + $0x3c] sm:$0xf]
    %v156 = vld [vmem:[%s4] sm:$0x1]
    %v158 = vperm.slane %v156, 0
    %v176 = vunpack.c.l.b16 %v140
    %v177 = vunpack.c.l.b16 %v141
    %v178 = vunpack.c.l.b16 %v142
    %v179 = vunpack.c.l.b16 %v143
    %v180 = vunpack.c.l.b16 %v144
    %v181 = vunpack.c.l.b16 %v145
    %v182 = vunpack.c.l.b16 %v146
    %v183 = vunpack.c.l.b16 %v147
    %v184 = vunpack.c.l.b16 %v148
    %v185 = vunpack.c.l.b16 %v149
    %v186 = vunpack.c.l.b16 %v150
    %v187 = vunpack.c.l.b16 %v151
    %v188 = vunpack.c.l.b16 %v152
    %v189 = vunpack.c.l.b16 %v153
    %v190 = vunpack.c.l.b16 %v154
    %v191 = vunpack.c.l.b16 %v155
    %v192 = vpack.c.b16 %v177, %v176
    %v193 = vpack.c.b16 %v179, %v178
    %v194 = vpack.c.b16 %v181, %v180
    %v195 = vpack.c.b16 %v183, %v182
    %v196 = vpack.c.b16 %v185, %v184
    %v197 = vpack.c.b16 %v187, %v186
    %v198 = vpack.c.b16 %v189, %v188
    %v199 = vpack.c.b16 %v191, %v190
    %208 = vmatpush.bf16.msra.mxu0 %v199
    %209 = vmatpush.bf16.msra.mxu0 %v198
    %210 = vmatpush.bf16.msra.mxu0 %v197
    %211 = vmatpush.bf16.msra.mxu0 %v196
    %212 = vmatpush.bf16.msra.mxu0 %v195
    %213 = vmatpush.bf16.msra.mxu0 %v194
    %214 = vmatpush.bf16.msra.mxu0 %v193
    %215 = vmatpush.bf16.msra.mxu0 %v192
    %216 = vmatmul.bf16.gmra.mxu0 %v139
    %v217 = vpop.f32.mrf.mxu0
    %v218 = vadd.f32 %v158, %v217
    %v219 = vpop.f32.mrf.mxu0
    %v220 = vadd.f32 %v158, %v219
    %221 = vdwg.mxu0
    %222 = vst [vmem:[%s5] sm:$0xff] %v218
    %223 = vst [vmem:[%s5 + $0x8] sm:$0xff] %v220
    // Predicated region
    $region30: #{mlp_forward.1} parent=1 // pred_check
      _
    $region31: #{mlp_forward.1} parent=1 // pred_check_branch
      %225 = sbr.rel (0) target = $region33
    $region32: #{mlp_forward.1} parent=1 // pred_region
      _
    $region33: #{mlp_forward.1} parent=1 // pred_fallthru
      _
    // Predicated region
    $region34: #{mlp_forward.1} parent=1 // pred_check
      _
    $region35: #{mlp_forward.1} parent=1 // pred_check_branch
      %227 = sbr.rel (0) target = $region37
    $region36: #{mlp_forward.1} parent=1 // pred_region
      _
    $region37: #{mlp_forward.1} parent=1 // pred_fallthru
      _
    %228 = vsyncpa [#allocation3], 1
    %229 = vsyncpa [#allocation5], 1

</llo_original>
